<compile_context>
chip_gen: v6e
topology: v6e:2x2x1
jax: 0.10.0
libtpu: 0.0.40
codegen_flags: <defaults>
</compile_context>

<pallas_src>
import functools
import math

import jax
import jax.numpy as jnp
from jax.experimental import pallas as pl
from jax.experimental.pallas import tpu as pltpu


def _round_up(x, m):
    return ((x + m - 1) // m) * m


def _sinusoidal_kernel(t_ref, f_ref, o_ref, *, half_dim, lane_aligned):
    # t_ref: (TB, 1) f32, f_ref: (1, half_dim) f32, o_ref: (TB, 2*half_dim)
    args = t_ref[...] * f_ref[...]          # (TB, half_dim) VPU broadcast-mul
    # NOTE: sin/cos lower to VPU polynomials; sharing the range reduction
    # between them is only worthwhile if profiling shows VALU-bound (it is
    # store/DMA-bound at these sizes), so keep the straightforward form.
    s = jnp.sin(args)
    c = jnp.cos(args)
    if lane_aligned:
        # half_dim % 128 == 0: both slice stores start on a lane boundary ->
        # unmasked lane-dense vst, no concat temporary.
        o_ref[:, :half_dim] = s.astype(o_ref.dtype)
        o_ref[:, half_dim:] = c.astype(o_ref.dtype)
    else:
        # Misaligned cos offset would lower to rotate + masked store; emit one
        # full-width lane-dense store instead.
        o_ref[...] = jnp.concatenate([s, c], axis=-1).astype(o_ref.dtype)


def sinusoidal_position_embeddings(time, dim, *, block_b=4096, out_dtype=jnp.float32):
    """time: (B,) float array -> (B, dim) array matching the PyTorch module.

    out_dtype defaults to float32 (reference semantics); pass jnp.bfloat16 to
    halve HBM write bytes when feeding a bf16 time-MLP.
    """
    assert dim % 2 == 0, "dim must be even (matches PyTorch concat of sin/cos halves)"
    half_dim = dim // 2
    assert half_dim > 1, "dim must be >= 4 to avoid division by zero in log scale"

    log_scale = math.log(10000.0) / (half_dim - 1)
    # Frequency table baked at trace time, passed as a small VMEM constant.
    freqs = jnp.exp(
        jnp.arange(half_dim, dtype=jnp.float32) * (-log_scale)
    ).reshape(1, half_dim)

    time2d = time.astype(jnp.float32).reshape(-1, 1)          # (B, 1)
    B = time2d.shape[0]
    B8 = _round_up(B, 8)

    # --- Adaptive batch tile -------------------------------------------------
    # Per-row VMEM cost per buffered copy: output row (dim * 4B) plus the
    # lane-padded (TB, 1) time row (one 128-lane f32 row per 8 sublanes ->
    # 512 B/row). Target ~2 MiB so per-step overhead (~0.35 us) is amortized
    # while double-buffered usage stays well inside even v5e's 16 MiB scoped
    # default and v7x's 32 MiB.
    bytes_per_row = dim * 4 + 512
    tb_target = max(8, (2 << 20) // bytes_per_row)
    tb_cap = min(_round_up(tb_target, 8), _round_up(block_b, 8), B8)

    # Balance tiles so padding waste is bounded (instead of up to TB-8 rows).
    num_tiles = -(-B // tb_cap)                       # cdiv(B, tb_cap)
    TB = _round_up(-(-B // num_tiles), 8)             # round_up(cdiv(B, nt), 8)
    Bp = TB * num_tiles
    if Bp != B:
        time2d = jnp.pad(time2d, ((0, Bp - B), (0, 0)))

    lane_aligned = (half_dim % 128 == 0)
    kernel = functools.partial(
        _sinusoidal_kernel, half_dim=half_dim, lane_aligned=lane_aligned
    )

    out = pl.pallas_call(
        kernel,
        out_shape=jax.ShapeDtypeStruct((Bp, dim), out_dtype),
        grid=(num_tiles,),
        in_specs=[
            pl.BlockSpec((TB, 1), lambda i: (i, 0)),          # time tile
            pl.BlockSpec((1, half_dim), lambda i: (0, 0)),    # shared freq table
        ],
        out_specs=pl.BlockSpec((TB, dim), lambda i: (i, 0)),
        compiler_params=pltpu.CompilerParams(
            dimension_semantics=("parallel",),
            # Explicit budget: <=~2 MiB/tile x double buffering + small inputs
            # fits easily; 32 MiB keeps headroom on every generation (v7x has
            # 64 MiB physical VMEM).
            vmem_limit_bytes=32 * 1024 * 1024,
        ),
    )(time2d, freqs)

    return out if Bp == B else out[:B]


def _reference(time, dim):
    half_dim = dim // 2
    scale = math.log(10000.0) / (half_dim - 1)
    freqs = jnp.exp(jnp.arange(half_dim, dtype=jnp.float32) * -scale)
    args = time.astype(jnp.float32)[:, None] * freqs[None, :]
    return jnp.concatenate([jnp.sin(args), jnp.cos(args)], axis=-1)


if __name__ == "__main__":
    key = jax.random.PRNGKey(0)

    # Small case matching the module spec (dim=32 -> half_dim=16, concat store path).
    B, DIM = 8, 32
    time = jax.random.uniform(key, (B,), dtype=jnp.float32, minval=0.0, maxval=1000.0)
    out = jax.block_until_ready(sinusoidal_position_embeddings(time, DIM))
    ref = _reference(time, DIM)
    assert out.shape == (B, DIM), out.shape
    assert jnp.allclose(out, ref, atol=1e-5, rtol=1e-5), "mismatch vs reference"

    # Tiled path: B not a multiple of the tile, balanced padding, concat path.
    B2, DIM2 = 300, 64
    time2 = jax.random.uniform(
        jax.random.PRNGKey(1), (B2,), dtype=jnp.float32, minval=0.0, maxval=1000.0
    )
    out2 = jax.block_until_ready(
        sinusoidal_position_embeddings(time2, DIM2, block_b=128)
    )
    ref2 = _reference(time2, DIM2)
    assert out2.shape == (B2, DIM2), out2.shape
    assert jnp.allclose(out2, ref2, atol=1e-5, rtol=1e-5), "mismatch vs reference (tiled)"

    # Lane-aligned two-store path (half_dim = 128 is a multiple of 128).
    B3, DIM3 = 40, 256
    time3 = jax.random.uniform(
        jax.random.PRNGKey(2), (B3,), dtype=jnp.float32, minval=0.0, maxval=1000.0
    )
    out3 = jax.block_until_ready(sinusoidal_position_embeddings(time3, DIM3))
    ref3 = _reference(time3, DIM3)
    assert out3.shape == (B3, DIM3), out3.shape
    assert jnp.allclose(out3, ref3, atol=1e-5, rtol=1e-5), "mismatch vs reference (aligned)"

    print("KERNEL_OK")
</pallas_src>

<mosaic_0001>
module attributes {stable_mosaic.version = 11 : i64} {
  func.func @_sinusoidal_kernel(%arg0: i32, %arg1: memref<8x1xf32, #tpu.memory_space<vmem>>, %arg2: memref<1x16xf32, #tpu.memory_space<vmem>>, %arg3: memref<8x32xf32, #tpu.memory_space<vmem>>) attributes {dimension_semantics = [#tpu.dimension_semantics<parallel>], iteration_bounds = array<i64: 1>, scalar_prefetch = 0 : i64, scratch_operands = 0 : i64, tpu.core_type = #tpu.core_type<tc>, window_params = [{transform_indices = @transform_0, window_bounds = array<i64: 8, 1>}, {pipeline_mode = #tpu.pipeline_mode<synchronous>, transform_indices = @transform_1, window_bounds = array<i64: 1, 16>}, {transform_indices = @transform_2, window_bounds = array<i64: 8, 32>}]} {
    %c0 = arith.constant 0 : index
    %c0_0 = arith.constant 0 : index
    %0 = vector.load %arg1[%c0, %c0_0] : memref<8x1xf32, #tpu.memory_space<vmem>>, vector<8x1xf32>
    %c0_1 = arith.constant 0 : index
    %c0_2 = arith.constant 0 : index
    %1 = vector.load %arg2[%c0_1, %c0_2] : memref<1x16xf32, #tpu.memory_space<vmem>>, vector<1x16xf32>
    %2 = vector.broadcast %0 : vector<8x1xf32> to vector<8x16xf32>
    %3 = vector.broadcast %1 : vector<1x16xf32> to vector<8x16xf32>
    %4 = arith.mulf %2, %3 : vector<8x16xf32>
    %5 = math.sin %4 : vector<8x16xf32>
    %6 = math.cos %4 : vector<8x16xf32>
    %7 = tpu.concatenate %5, %6 in 1 : vector<8x16xf32>, vector<8x16xf32> -> vector<8x32xf32>
    %c0_3 = arith.constant 0 : index
    %c0_4 = arith.constant 0 : index
    %8 = vector.load %arg3[%c0_3, %c0_4] : memref<8x32xf32, #tpu.memory_space<vmem>>, vector<8x32xf32>
    tpu.vector_store %arg3[%c0_3, %c0_4], %7 {strides = array<i32>} : memref<8x32xf32, #tpu.memory_space<vmem>>, vector<8x32xf32>,
    return
  }
  func.func @transform_0(%arg0: i32) -> (i32, i32) {
    %c0_i32 = arith.constant 0 : i32
    %c0_i32_0 = arith.constant 0 : i32
    return %arg0, %c0_i32 : i32, i32
  }
  func.func @transform_1(%arg0: i32) -> (i32, i32) {
    %c0_i32 = arith.constant 0 : i32
    %c0_i32_0 = arith.constant 0 : i32
    %c0_i32_1 = arith.constant 0 : i32
    return %c0_i32, %c0_i32_0 : i32, i32
  }
  func.func @transform_2(%arg0: i32) -> (i32, i32) {
    %c0_i32 = arith.constant 0 : i32
    %c0_i32_0 = arith.constant 0 : i32
    return %arg0, %c0_i32 : i32, i32
  }
}

</mosaic_0001>

<llo_original>
// kernel: tpu_custom_call.1
$region0: #{tpu_custom_call.1}
  #allocation0 [shape = 'u32[]', space=smem, size = 0x4, offset = 0x4, fixed_abs, tag = 'smem constant byte address 0x4 - core index']
  #allocation1 [shape = 'u32[144,128]{1,0:T(1,128)}', space=vmem, size = 0x12000, scoped, tag = 'internal scratch']
  %s0 = inlined_call_operand.vmem [shape: f32[8,1], index: 0, kind: input, shape index: {}]
  %s1 = inlined_call_operand.vmem [shape: f32[1,16], index: 1, kind: input, shape index: {}]
  %s2 = inlined_call_operand.hbm [shape: f32[8,32], index: 2, kind: output, shape index: {}]
  %s3 = sld [smem:[#allocation0]]
  $region18: #{tpu_custom_call.1} parent=0
    _
  %s5 = ssub.s32 1, %s3
  %s6 = scalar_select 0, %s5, %s3
  $region1: #{tpu_custom_call.1} parent=0
    #allocation2 [shape = 'u8[4096]{0}', space=vmem, size = 0x1000, scoped, tag = 'output window, operand 0, single buffered']
    #allocation3 [shape = 's32[1]{0}', space=sflag, size = 0x4, scoped, tag = 'scoped memory for tpu_custom_call.1']
    %7 = vsyncpa [#allocation3], 0
    // Predicated region
    $region2: #{tpu_custom_call.1} parent=1 // pred_check
      _
    $region3: #{tpu_custom_call.1} parent=1 // pred_check_branch
      %9 = sbr.rel (0) target = $region5
    $region4: #{tpu_custom_call.1} parent=1 // pred_region
      _
    $region5: #{tpu_custom_call.1} parent=1 // pred_fallthru
      _
    // Predicated region
    $region6: #{tpu_custom_call.1} parent=1 // pred_check
      _
    $region7: #{tpu_custom_call.1} parent=1 // pred_check_branch
      %11 = sbr.rel (0) target = $region9
    $region8: #{tpu_custom_call.1} parent=1 // pred_region
      _
    $region9: #{tpu_custom_call.1} parent=1 // pred_fallthru
      _
    %v12 = vld [vmem:[%s0] sm:$0xff]
    %v13 = vld [vmem:[%s1] sm:$0x1]
    %15 = vset.pattern.permute.xlu0 0
    %16 = vperm.xlu0 %15, %v12
    %v17 = vpop.permute.xlu0 %16
    %v20 = vlaneseq
    %v21 = vshrl.u32 %v20, 7
    %v22 = vsub.s32 0, %v21
    %v23 = vrot.slane %v13, %v22
    %v25 = vmul.f32 %v17, %v23
    %v26 = vand.u32 2147483647, %v25
    %vm27 = vcmp.le.f32.partialorder %v26, 0.7853982
    %vm28 = vcmp.lt.s32.totalorder %v25, 0
    %v29 = vand.u32 %v25, 2139095040
    %v30 = vshrl.u32 %v29, 23
    %v31 = vsub.s32 %v30, 127
    %v32 = vand.u32 2147483647, %v25
    %v33 = vand.u32 %v32, 8388607
    %v34 = vor.u32 %v33, 8388608
    %v35 = vsub.s32 0, %v34
    %v36 = vadd.s32 %v31, 1
    %vm37 = vcmp.gt.s32.totalorder %v36, 0
    %v38 = vsel %vm37, %v36, 0
    %v39 = vshrl.u32 %v38, 5
    %v40 = vand.u32 %v38, 31
    %v41 = vsub.s32 32, %v40
    %v42 = vshrl.u32 683565275, %v41
    %v43 = vshll.u32 683565275, %v40
    %v44 = vshrl.u32 2475754826, %v41
    %v45 = vor.u32 %v43, %v44
    %v46 = vshll.u32 2475754826, %v40
    %v47 = vshrl.u32 2131351028, %v41
    %v48 = vor.u32 %v46, %v47
    %v49 = vshll.u32 2131351028, %v40
    %v50 = vshrl.u32 2102212464, %v41
    %v51 = vor.u32 %v49, %v50
    %v52 = vshll.u32 2102212464, %v40
    %v53 = vshrl.u32 920167782, %v41
    %v54 = vor.u32 %v52, %v53
    %v55 = vshll.u32 920167782, %v40
    %v56 = vshrl.u32 1326507024, %v41
    %v57 = vor.u32 %v55, %v56
    %vm58 = vcmp.lt.s32.totalorder %v39, 1
    %vm59 = vcmp.lt.s32.totalorder %v39, 2
    %vm60 = vcmp.lt.s32.totalorder %v39, 3
    %vm61 = vcmp.lt.s32.totalorder %v39, 4
    %v62 = vsel %vm58, %v42, %v45
    %v63 = vsel %vm61, %v51, 2102212464
    %v64 = vsel %vm60, %v48, %v63
    %v65 = vsel %vm59, %v62, %v64
    %v66 = vsel %vm58, %v45, %v48
    %v67 = vsel %vm61, %v54, 920167782
    %v68 = vsel %vm60, %v51, %v67
    %v69 = vsel %vm59, %v66, %v68
    %v70 = vsel %vm58, %v48, %v51
    %v71 = vsel %vm61, %v57, 1326507024
    %v72 = vsel %vm60, %v54, %v71
    %v73 = vsel %vm59, %v70, %v72
    %v74 = vshll.u32 %v34, 8
    %v75 = vmul.u32.u64.compose %v74, %v73
    %v76 = vextract.low.u32 %v75
    %v77 = vextract.high.u32 %v75
    %v78 = vmul.u32.u64.compose %v74, %v69
    %v79 = vextract.low.u32 %v78
    %v80 = vextract.high.u32 %v78
    %v81 = vmul.u32 %v74, %v65
    %v82 = vadd.s32 %v77, %v79
    %vm83 = vc.u32 %v77, %v79
    %v84 = vadd.s32 %v80, 1
    %v85 = vsel %vm83, %v84, %v80
    %v86 = vadd.s32 %v81, %v85
    %v87 = vadd.s32 %v86, 536870912
    %v88 = vshrl.u32 %v87, 30
    %v89 = vshll.u32 %v88, 30
    %v90 = vsub.s32 %v86, %v89
    %vm91 = vcmp.lt.s32.totalorder %v90, 0
    %v92 = vsub.s32 0, %v90
    %v93 = vsel %vm91, %v92, %v90
    %v94 = vclz %v93
    %v95 = vsub.s32 %v94, 2
    %vm96 = vcmp.gt.s32.totalorder 0, %v95
    %v97 = vsel %vm96, 0, %v95
    %v98 = vsub.s32 32, %v97
    %v99 = vshll.u32 %v90, %v97
    %v100 = vshrl.u32 %v82, %v98
    %v101 = vor.u32 %v99, %v100
    %v102 = vsub.s32 4294967266, %v97
    %v103 = vadd.s32 %v102, 127
    %v104 = vshll.u32 %v103, 23
    %v105 = vor.u32 4788187, %v104
    %v106 = vand.u32 2147483647, %v105
    %v108 = vcvt.s32.f32 %v101
    %v109 = vmul.f32 %v108, %v106
    %v110 = vxor.u32 %v109, 2147483648
    %v111 = vsel %vm28, %v110, %v109
    %v112 = vsub.s32 4, %v88
    %v113 = vsel %vm28, %v112, %v88
    %v114 = vsel %vm27, %v25, %v111
    %v115 = vsel %vm27, 0, %v113
    %v116 = vcosq.f32.pop %v114
    %v117 = vsinq.f32.pop %v114
    %vm118 = vweird.f32 %v25
    %v119 = vadd.s32 %v115, 3
    %v120 = vand.u32 %v119, 3
    %vm121 = vcmp.lt.s32.totalorder %v120, 2
    %vm122 = vcmp.eq.s32.totalorder %v120, 0
    %v123 = vxor.u32 %v117, 2147483648
    %v124 = vsel %vm122, %v116, %v123
    %vm125 = vcmp.eq.s32.totalorder %v120, 2
    %v126 = vxor.u32 %v116, 2147483648
    %v127 = vsel %vm125, %v126, %v117
    %v128 = vsel %vm121, %v124, %v127
    %v129 = vsel %vm118, nan, %v128
    %v130 = vand.u32 2147483647, %v25
    %vm131 = vcmp.le.f32.partialorder %v130, 0.7853982
    %vm132 = vcmp.lt.s32.totalorder %v25, 0
    %v133 = vand.u32 %v25, 2139095040
    %v134 = vshrl.u32 %v133, 23
    %v135 = vsub.s32 %v134, 127
    %v136 = vand.u32 2147483647, %v25
    %v137 = vand.u32 %v136, 8388607
    %v138 = vor.u32 %v137, 8388608
    %v139 = vsub.s32 0, %v138
    %v140 = vadd.s32 %v135, 1
    %vm141 = vcmp.gt.s32.totalorder %v140, 0
    %v142 = vsel %vm141, %v140, 0
    %v143 = vshrl.u32 %v142, 5
    %v144 = vand.u32 %v142, 31
    %v145 = vsub.s32 32, %v144
    %v146 = vshrl.u32 683565275, %v145
    %v147 = vshll.u32 683565275, %v144
    %v148 = vshrl.u32 2475754826, %v145
    %v149 = vor.u32 %v147, %v148
    %v150 = vshll.u32 2475754826, %v144
    %v151 = vshrl.u32 2131351028, %v145
    %v152 = vor.u32 %v150, %v151
    %v153 = vshll.u32 2131351028, %v144
    %v154 = vshrl.u32 2102212464, %v145
    %v155 = vor.u32 %v153, %v154
    %v156 = vshll.u32 2102212464, %v144
    %v157 = vshrl.u32 920167782, %v145
    %v158 = vor.u32 %v156, %v157
    %v159 = vshll.u32 920167782, %v144
    %v160 = vshrl.u32 1326507024, %v145
    %v161 = vor.u32 %v159, %v160
    %vm162 = vcmp.lt.s32.totalorder %v143, 1
    %vm163 = vcmp.lt.s32.totalorder %v143, 2
    %vm164 = vcmp.lt.s32.totalorder %v143, 3
    %vm165 = vcmp.lt.s32.totalorder %v143, 4
    %v166 = vsel %vm162, %v146, %v149
    %v167 = vsel %vm165, %v155, 2102212464
    %v168 = vsel %vm164, %v152, %v167
    %v169 = vsel %vm163, %v166, %v168
    %v170 = vsel %vm162, %v149, %v152
    %v171 = vsel %vm165, %v158, 920167782
    %v172 = vsel %vm164, %v155, %v171
    %v173 = vsel %vm163, %v170, %v172
    %v174 = vsel %vm162, %v152, %v155
    %v175 = vsel %vm165, %v161, 1326507024
    %v176 = vsel %vm164, %v158, %v175
    %v177 = vsel %vm163, %v174, %v176
    %v178 = vshll.u32 %v138, 8
    %v179 = vmul.u32.u64.compose %v178, %v177
    %v180 = vextract.low.u32 %v179
    %v181 = vextract.high.u32 %v179
    %v182 = vmul.u32.u64.compose %v178, %v173
    %v183 = vextract.low.u32 %v182
    %v184 = vextract.high.u32 %v182
    %v185 = vmul.u32 %v178, %v169
    %v186 = vadd.s32 %v181, %v183
    %vm187 = vc.u32 %v181, %v183
    %v188 = vadd.s32 %v184, 1
    %v189 = vsel %vm187, %v188, %v184
    %v190 = vadd.s32 %v185, %v189
    %v191 = vadd.s32 %v190, 536870912
    %v192 = vshrl.u32 %v191, 30
    %v193 = vshll.u32 %v192, 30
    %v194 = vsub.s32 %v190, %v193
    %vm195 = vcmp.lt.s32.totalorder %v194, 0
    %v196 = vsub.s32 0, %v194
    %v197 = vsel %vm195, %v196, %v194
    %v198 = vclz %v197
    %v199 = vsub.s32 %v198, 2
    %vm200 = vcmp.gt.s32.totalorder 0, %v199
    %v201 = vsel %vm200, 0, %v199
    %v202 = vsub.s32 32, %v201
    %v203 = vshll.u32 %v194, %v201
    %v204 = vshrl.u32 %v186, %v202
    %v205 = vor.u32 %v203, %v204
    %v206 = vsub.s32 4294967266, %v201
    %v207 = vadd.s32 %v206, 127
    %v208 = vshll.u32 %v207, 23
    %v209 = vor.u32 4788187, %v208
    %v210 = vand.u32 2147483647, %v209
    %v212 = vcvt.s32.f32 %v205
    %v213 = vmul.f32 %v212, %v210
    %v214 = vxor.u32 %v213, 2147483648
    %v215 = vsel %vm132, %v214, %v213
    %v216 = vsub.s32 4, %v192
    %v217 = vsel %vm132, %v216, %v192
    %v218 = vsel %vm131, %v25, %v215
    %v219 = vsel %vm131, 0, %v217
    %v220 = vcosq.f32.pop %v218
    %v221 = vsinq.f32.pop %v218
    %vm222 = vweird.f32 %v25
    %v223 = vand.u32 %v219, 3
    %vm224 = vcmp.lt.s32.totalorder %v223, 2
    %vm225 = vcmp.eq.s32.totalorder %v223, 0
    %v226 = vxor.u32 %v221, 2147483648
    %v227 = vsel %vm225, %v220, %v226
    %vm228 = vcmp.eq.s32.totalorder %v223, 2
    %v229 = vxor.u32 %v220, 2147483648
    %v230 = vsel %vm228, %v229, %v221
    %v231 = vsel %vm224, %v227, %v230
    %v232 = vsel %vm222, nan, %v231
    %234 = vrot.lane.b32.xlu0 %v232, 16
    %v235 = vpop.permute.xlu0 %234
    %vm237 = vcmask 130048
    %v238 = vsel %vm237, %v129, %v235
    %vm239 = vcmask 261120
    %240 = vst.msk [vmem:[#allocation2] sm:$0xff] %vm239, %v238
    // Predicated region
    $region10: #{tpu_custom_call.1} parent=1 // pred_check
      _
    $region11: #{tpu_custom_call.1} parent=1 // pred_check_branch
      %242 = sbr.rel (0) target = $region13
    $region12: #{tpu_custom_call.1} parent=1 // pred_region
      %s244 = ssub.s32 128, 128
      %245 = vsyncadd [#allocation3], %s244
      %s247 = sshll.u32 [#allocation2], 4
      %s248 = int_to_ptr.vmem [resolvable:$true] %s247
      %250 = dma.vmem_to_hbm [thread:$0]  %s248, 128, %s2, [#allocation3]
    $region13: #{tpu_custom_call.1} parent=1 // pred_fallthru
      _
    // Predicated region
    $region14: #{tpu_custom_call.1} parent=1 // pred_check
      _
    $region15: #{tpu_custom_call.1} parent=1 // pred_check_branch
      %252 = sbr.rel (0) target = $region17
    $region16: #{tpu_custom_call.1} parent=1 // pred_region
      %253 = dma.done [#allocation3], 128
    $region17: #{tpu_custom_call.1} parent=1 // pred_fallthru
      _
    %254 = vsyncpa [#allocation3], 1

</llo_original>
